<compile_context>
chip_gen: v7x
topology: tpu7x:2x2x1
jax: 0.10.0
libtpu: 0.0.40
codegen_flags: <defaults>
</compile_context>

<pallas_src>
import functools

import numpy as np
import jax
import jax.numpy as jnp
from jax.experimental import pallas as pl
from jax.experimental.pallas import tpu as pltpu

K = 3            # kernel size
PAD = 1          # padding
EPS_PC = 1e-8    # partial-conv epsilon
EPS_BN = 1e-5    # BatchNorm2d default eps


def _pcbactiv_kernel(a_ref, b_ref, bias_ref, gamma_ref, beta_ref,
                     gsum_ref, gbc_ref, h_ref, hm_ref,
                     *, NH, W, Cin, Cout):
    """Fused PartialConv(3x3, s=1, p=1, bias) + BatchNorm(train) + ReLU.

    a_ref    : (N*H, K*2*Wp*Cin)  im2row'ed rows; per-kh lanes = [x*mask | mask]
    b_ref    : (K*2*Wp*Cin, 2*W*Cout) banded block-diagonal matrix:
               left 128 lanes -> conv(x*mask) (no bias),
               right 128 lanes -> conv(mask, all-ones), Cout-broadcast
    bias_ref, gamma_ref, beta_ref : (1, W*Cout)  pre-broadcast per-channel params
    gsum_ref : (W*Cout, Cout)  per-(w,co)-lane -> per-channel summation matrix
    gbc_ref  : (Cout, W*Cout)  per-channel -> per-(w,co)-lane broadcast matrix
    h_ref    : (N*H, W*Cout)   BN + ReLU output (lane dense)
    hm_ref   : (N*H, W*Cout)   updated mask (broadcast over Cout)
    """
    WC = W * Cout
    slide_winsize = float(Cin * K * K)
    inv_count = 1.0 / float(NH * W)
    f32 = jnp.float32

    # --- single deep MXU matmul: conv(x*m) and conv(mask, ones) together ----
    res = jnp.dot(a_ref[...], b_ref[...], preferred_element_type=f32)  # (NH, 2*WC)
    conv_nb = res[:, :WC]            # raw conv output, no bias   (NH, WC)
    msum = res[:, WC:]               # mask window sums, Cout-broadcast

    # --- partial-conv epilogue (vectorized over the full N*H slab) ----------
    update_mask = jnp.clip(msum, 0.0, 1.0)
    # exact f32 division; where-guard keeps fully-masked windows finite
    mask_ratio = jnp.where(msum > 0.0,
                           slide_winsize / (msum + EPS_PC),
                           0.0) * update_mask
    # ((raw - bias) * ratio + bias) * update == (conv_nb * ratio + bias) * update
    x2 = (conv_nb * mask_ratio + bias_ref[...]) * update_mask          # (NH, WC)
    hm_ref[...] = update_mask

    # --- BatchNorm (training mode: batch stats, biased variance) ------------
    # TODO(synk): PyTorch also updates running_mean/running_var (unbiased var);
    # only the normalized forward activation is produced here.
    s_wc = jnp.sum(x2, axis=0, keepdims=True)                          # (1, WC)
    sq_wc = jnp.sum(x2 * x2, axis=0, keepdims=True)                    # (1, WC)
    stat_c = jnp.dot(jnp.concatenate([s_wc, sq_wc], axis=0), gsum_ref[...],
                     preferred_element_type=f32) * inv_count           # (2, Cout)
    mean_c = stat_c[0:1]                                               # (1, Cout)
    var_c = jnp.maximum(stat_c[1:2] - mean_c * mean_c, 0.0)            # (1, Cout)
    inv_std_c = jax.lax.rsqrt(var_c + EPS_BN)                          # (1, Cout)
    bc = jnp.dot(jnp.concatenate([mean_c, inv_std_c], axis=0), gbc_ref[...],
                 preferred_element_type=f32)                           # (2, WC)
    scale_wc = gamma_ref[...] * bc[1:2]                                # (1, WC)
    shift_wc = beta_ref[...] - bc[0:1] * scale_wc                      # (1, WC)
    h_ref[...] = jnp.maximum(x2 * scale_wc + shift_wc, 0.0)            # ReLU


def precompute_pcb_params(weight_oihw, bias, gamma, beta, H, W):
    """Build all weight-only constants ONCE (per weight update), off the hot path.

    weight_oihw : (Cout, Cin, K, K);  bias/gamma/beta : (Cout,)
    Returns a pytree of arrays consumed by pcb_activ_forward.
    """
    Cout, Cin = weight_oihw.shape[0], weight_oihw.shape[1]
    Hp, Wp = H + 2 * PAD, W + 2 * PAD
    SRC = Wp * Cin
    WC = W * Cout
    f32 = jnp.float32

    # Band structure (numpy, trace-time constants).
    wp_i = np.arange(Wp)
    w_i = np.arange(W)
    kw_off = wp_i[:, None] - w_i[None, :]                              # (Wp, W)
    valid = (kw_off >= 0) & (kw_off < K)
    T = np.stack([(kw_off == k) for k in range(K)], axis=0).astype(np.float32)
    mask_blk = np.broadcast_to(valid[:, None, :, None],
                               (Wp, Cin, W, Cout)).astype(np.float32).reshape(SRC, WC)
    bot_np = np.concatenate([np.zeros((SRC, WC), np.float32), mask_blk], axis=1)
    eye = np.eye(Cout, dtype=np.float32)
    gsum = jnp.asarray(np.tile(eye, (W, 1)))                           # (WC, Cout)
    gbc = jnp.asarray(np.tile(eye, (W, 1)).T)                          # (Cout, WC)

    # Banded conv matrix from the weight; mask-sum conv in the right half.
    # b[kh, wp*Cin+ci, w*Cout+co] = weight[co, ci, kh, wp - w] on the band.
    b_data = jnp.einsum('kpw,oihk->hpiwo', jnp.asarray(T),
                        weight_oihw.astype(f32)).reshape(K, SRC, WC)
    top = jnp.concatenate([b_data, jnp.zeros((K, SRC, WC), f32)], axis=2)
    bot = jnp.broadcast_to(jnp.asarray(bot_np)[None], (K, SRC, 2 * WC))
    b_flat = jnp.concatenate([top, bot], axis=1).reshape(K * 2 * SRC, 2 * WC)

    # Pre-broadcast per-channel params to WC lanes (lane w*Cout+co -> channel co).
    bias_wc = jnp.tile(bias.astype(f32).reshape(1, Cout), (1, W))      # (1, WC)
    gamma_wc = jnp.tile(gamma.astype(f32).reshape(1, Cout), (1, W))    # (1, WC)
    beta_wc = jnp.tile(beta.astype(f32).reshape(1, Cout), (1, W))      # (1, WC)

    return {"b": b_flat, "bias_wc": bias_wc, "gamma_wc": gamma_wc,
            "beta_wc": beta_wc, "gsum": gsum, "gbc": gbc, "cout": Cout}


def pcb_activ_forward(x_nchw, mask_nchw, params):
    """Forward of PCBActiv(sample='none-3', bn=True, activ='relu').

    x_nchw, mask_nchw : (N, Cin, H, W) float32
    params            : output of precompute_pcb_params
    Returns (h, h_mask), both (N, Cout, H, W), matching the PyTorch module.
    """
    N, Cin, H, W = x_nchw.shape
    Cout = params["gbc"].shape[0]
    Hp, Wp = H + 2 * PAD, W + 2 * PAD
    SRC = Wp * Cin
    WC = W * Cout
    f32 = jnp.float32

    # --- boundary glue: NCHW -> lane-dense im2row rows -----------------------
    x = jnp.transpose(x_nchw, (0, 2, 3, 1)).astype(f32)                # (N,H,W,Cin)
    m = jnp.transpose(mask_nchw, (0, 2, 3, 1)).astype(f32)
    pad = ((0, 0), (PAD, PAD), (PAD, PAD), (0, 0))
    xm_p = jnp.pad(x * m, pad).reshape(N, Hp, SRC)
    m_p = jnp.pad(m, pad).reshape(N, Hp, SRC)
    a_p = jnp.concatenate([xm_p, m_p], axis=-1)                        # (N, Hp, 2*SRC)
    # im2row over kh in the wrapper -> one deep matmul inside the kernel
    a_rows = jnp.concatenate([a_p[:, kh:kh + H, :] for kh in range(K)], axis=-1)
    a_op = a_rows.reshape(N * H, K * 2 * SRC)                          # (N*H, 432)

    kern = functools.partial(_pcbactiv_kernel, NH=N * H, W=W, Cin=Cin, Cout=Cout)
    vmem = pl.BlockSpec(memory_space=pltpu.MemorySpace.VMEM)

    # Grid-less call: single invocation, whole-array VMEM blocks, no useless
    # double-buffering (everything here is a few hundred KB total).
    h2, hm2 = pl.pallas_call(
        kern,
        out_shape=(jax.ShapeDtypeStruct((N * H, WC), f32),
                   jax.ShapeDtypeStruct((N * H, WC), f32)),
        in_specs=[vmem] * 7,
        out_specs=(vmem, vmem),
    )(a_op, params["b"], params["bias_wc"], params["gamma_wc"],
      params["beta_wc"], params["gsum"], params["gbc"])

    # --- boundary glue: lane-dense (N*H, W*Cout) -> NCHW ----------------------
    h_out = jnp.transpose(h2.reshape(N, H, W, Cout), (0, 3, 1, 2))
    hm_out = jnp.transpose(hm2.reshape(N, H, W, Cout), (0, 3, 1, 2))
    return h_out, hm_out


if __name__ == "__main__":
    # Small shapes consistent with the module: PCBActiv(in_ch=4, out_ch=8)
    N, Cin, Cout, H, W = 2, 4, 8, 16, 16

    key = jax.random.PRNGKey(0)
    k_x, k_m, k_w, k_b = jax.random.split(key, 4)

    x = jax.random.normal(k_x, (N, Cin, H, W), dtype=jnp.float32)
    # binary mask (holes), like an inpainting mask
    mask = (jax.random.uniform(k_m, (N, Cin, H, W)) > 0.3).astype(jnp.float32)

    # Deterministic parameter init (shapes from nn.Conv2d / nn.BatchNorm2d).
    fan_in = Cin * K * K
    bound = 1.0 / (fan_in ** 0.5)
    weight = jax.random.uniform(k_w, (Cout, Cin, K, K),
                                minval=-bound, maxval=bound, dtype=jnp.float32)
    bias = jax.random.uniform(k_b, (Cout,), minval=-bound, maxval=bound,
                              dtype=jnp.float32)
    gamma = jnp.ones((Cout,), jnp.float32)   # fresh BatchNorm2d weight
    beta = jnp.zeros((Cout,), jnp.float32)   # fresh BatchNorm2d bias

    # Weight-only constants: built once, reused for every forward call.
    params = precompute_pcb_params(weight, bias, gamma, beta, H, W)
    params = jax.tree_util.tree_map(
        lambda a: jax.device_put(a) if isinstance(a, jnp.ndarray) else a, params)

    fwd = jax.jit(pcb_activ_forward)
    h, h_mask = fwd(x, mask, params)
    jax.block_until_ready((h, h_mask))

    assert h.shape == (N, Cout, H, W) and h_mask.shape == (N, Cout, H, W)
    assert bool(jnp.all(jnp.isfinite(h))) and bool(jnp.all(jnp.isfinite(h_mask)))
    print("KERNEL_OK")
</pallas_src>

<mosaic_0001>
module attributes {stable_mosaic.version = 11 : i64} {
  func.func @_pcbactiv_kernel(%arg0: memref<32x432xf32, #tpu.memory_space<vmem>>, %arg1: memref<432x256xf32, #tpu.memory_space<vmem>>, %arg2: memref<1x128xf32, #tpu.memory_space<vmem>>, %arg3: memref<1x128xf32, #tpu.memory_space<vmem>>, %arg4: memref<1x128xf32, #tpu.memory_space<vmem>>, %arg5: memref<128x8xf32, #tpu.memory_space<vmem>>, %arg6: memref<8x128xf32, #tpu.memory_space<vmem>>, %arg7: memref<32x128xf32, #tpu.memory_space<vmem>>, %arg8: memref<32x128xf32, #tpu.memory_space<vmem>>) attributes {dimension_semantics = [], scalar_prefetch = 0 : i64, scratch_operands = 0 : i64, tpu.core_type = #tpu.core_type<tc>} {
    %c0 = arith.constant 0 : index
    %c0_0 = arith.constant 0 : index
    %0 = vector.load %arg0[%c0, %c0_0] : memref<32x432xf32, #tpu.memory_space<vmem>>, vector<32x432xf32>
    %c0_1 = arith.constant 0 : index
    %c0_2 = arith.constant 0 : index
    %1 = vector.load %arg1[%c0_1, %c0_2] : memref<432x256xf32, #tpu.memory_space<vmem>>, vector<432x256xf32>
    %cst = arith.constant dense<0.000000e+00> : vector<32x256xf32>
    %2 = tpu.matmul %0, %1, %cst {dimension_numbers = #tpu.dot_dimension_numbers<[1], [0], [0], [1], [0, 0, 1, 1], [], []>} : vector<32x432xf32>, vector<432x256xf32>, vector<32x256xf32> -> vector<32x256xf32>
    %3 = vector.extract_strided_slice %2 {offsets = [0, 0], sizes = [32, 128], strides = [1, 1]} : vector<32x256xf32> to vector<32x128xf32>
    %4 = vector.extract_strided_slice %2 {offsets = [0, 128], sizes = [32, 128], strides = [1, 1]} : vector<32x256xf32> to vector<32x128xf32>
    %cst_3 = arith.constant 0.000000e+00 : f32
    %cst_4 = arith.constant 1.000000e+00 : f32
    %5 = vector.broadcast %cst_3 : f32 to vector<32x128xf32>
    %6 = arith.maximumf %5, %4 : vector<32x128xf32>
    %7 = vector.broadcast %cst_4 : f32 to vector<32x128xf32>
    %8 = arith.minimumf %7, %6 : vector<32x128xf32>
    %cst_5 = arith.constant 0.000000e+00 : f32
    %9 = vector.broadcast %cst_5 : f32 to vector<32x128xf32>
    %10 = arith.cmpf ogt, %4, %9 : vector<32x128xf32>
    %cst_6 = arith.constant 9.99999993E-9 : f32
    %11 = vector.broadcast %cst_6 : f32 to vector<32x128xf32>
    %12 = arith.addf %4, %11 : vector<32x128xf32>
    %cst_7 = arith.constant 3.600000e+01 : f32
    %13 = vector.broadcast %cst_7 : f32 to vector<32x128xf32>
    %14 = arith.divf %13, %12 : vector<32x128xf32>
    %cst_8 = arith.constant 0.000000e+00 : f32
    %15 = vector.broadcast %cst_8 : f32 to vector<32x128xf32>
    %16 = arith.select %10, %14, %15 : vector<32x128xi1>, vector<32x128xf32>
    %17 = arith.mulf %16, %8 : vector<32x128xf32>
    %18 = arith.mulf %3, %17 : vector<32x128xf32>
    %c0_9 = arith.constant 0 : index
    %c0_10 = arith.constant 0 : index
    %19 = vector.load %arg2[%c0_9, %c0_10] : memref<1x128xf32, #tpu.memory_space<vmem>>, vector<1x128xf32>
    %20 = vector.broadcast %19 : vector<1x128xf32> to vector<32x128xf32>
    %21 = arith.addf %18, %20 : vector<32x128xf32>
    %22 = arith.mulf %21, %8 : vector<32x128xf32>
    %c0_11 = arith.constant 0 : index
    %c0_12 = arith.constant 0 : index
    %23 = vector.load %arg8[%c0_11, %c0_12] : memref<32x128xf32, #tpu.memory_space<vmem>>, vector<32x128xf32>
    tpu.vector_store %arg8[%c0_11, %c0_12], %8 {strides = array<i32>} : memref<32x128xf32, #tpu.memory_space<vmem>>, vector<32x128xf32>,
    %cst_13 = arith.constant dense<0.000000e+00> : vector<128xf32>
    %24 = vector.multi_reduction <add>, %22, %cst_13 [0] : vector<32x128xf32> to vector<128xf32>
    %25 = vector.shape_cast %24 : vector<128xf32> to vector<1x128xf32>
    %26 = arith.mulf %22, %22 : vector<32x128xf32>
    %cst_14 = arith.constant dense<0.000000e+00> : vector<128xf32>
    %27 = vector.multi_reduction <add>, %26, %cst_14 [0] : vector<32x128xf32> to vector<128xf32>
    %28 = vector.shape_cast %27 : vector<128xf32> to vector<1x128xf32>
    %29 = tpu.concatenate %25, %28 in 0 : vector<1x128xf32>, vector<1x128xf32> -> vector<2x128xf32>
    %c0_15 = arith.constant 0 : index
    %c0_16 = arith.constant 0 : index
    %30 = vector.load %arg5[%c0_15, %c0_16] : memref<128x8xf32, #tpu.memory_space<vmem>>, vector<128x8xf32>
    %cst_17 = arith.constant dense<0.000000e+00> : vector<2x8xf32>
    %31 = tpu.matmul %29, %30, %cst_17 {dimension_numbers = #tpu.dot_dimension_numbers<[1], [0], [0], [1], [0, 0, 1, 1], [], []>} : vector<2x128xf32>, vector<128x8xf32>, vector<2x8xf32> -> vector<2x8xf32>
    %cst_18 = arith.constant 0.001953125 : f32
    %32 = vector.broadcast %cst_18 : f32 to vector<2x8xf32>
    %33 = arith.mulf %31, %32 : vector<2x8xf32>
    %34 = vector.extract_strided_slice %33 {offsets = [0, 0], sizes = [1, 8], strides = [1, 1]} : vector<2x8xf32> to vector<1x8xf32>
    %35 = vector.extract_strided_slice %33 {offsets = [1, 0], sizes = [1, 8], strides = [1, 1]} : vector<2x8xf32> to vector<1x8xf32>
    %36 = arith.mulf %34, %34 : vector<1x8xf32>
    %37 = arith.subf %35, %36 : vector<1x8xf32>
    %cst_19 = arith.constant 0.000000e+00 : f32
    %38 = vector.broadcast %cst_19 : f32 to vector<1x8xf32>
    %39 = arith.maximumf %37, %38 : vector<1x8xf32>
    %cst_20 = arith.constant 9.99999974E-6 : f32
    %40 = vector.broadcast %cst_20 : f32 to vector<1x8xf32>
    %41 = arith.addf %39, %40 : vector<1x8xf32>
    %42 = math.rsqrt %41 : vector<1x8xf32>
    %43 = tpu.concatenate %34, %42 in 0 : vector<1x8xf32>, vector<1x8xf32> -> vector<2x8xf32>
    %c0_21 = arith.constant 0 : index
    %c0_22 = arith.constant 0 : index
    %44 = vector.load %arg6[%c0_21, %c0_22] : memref<8x128xf32, #tpu.memory_space<vmem>>, vector<8x128xf32>
    %cst_23 = arith.constant dense<0.000000e+00> : vector<2x128xf32>
    %45 = tpu.matmul %43, %44, %cst_23 {dimension_numbers = #tpu.dot_dimension_numbers<[1], [0], [0], [1], [0, 0, 1, 1], [], []>} : vector<2x8xf32>, vector<8x128xf32>, vector<2x128xf32> -> vector<2x128xf32>
    %c0_24 = arith.constant 0 : index
    %c0_25 = arith.constant 0 : index
    %46 = vector.load %arg3[%c0_24, %c0_25] : memref<1x128xf32, #tpu.memory_space<vmem>>, vector<1x128xf32>
    %47 = vector.extract_strided_slice %45 {offsets = [1, 0], sizes = [1, 128], strides = [1, 1]} : vector<2x128xf32> to vector<1x128xf32>
    %48 = arith.mulf %46, %47 : vector<1x128xf32>
    %c0_26 = arith.constant 0 : index
    %c0_27 = arith.constant 0 : index
    %49 = vector.load %arg4[%c0_26, %c0_27] : memref<1x128xf32, #tpu.memory_space<vmem>>, vector<1x128xf32>
    %50 = vector.extract_strided_slice %45 {offsets = [0, 0], sizes = [1, 128], strides = [1, 1]} : vector<2x128xf32> to vector<1x128xf32>
    %51 = arith.mulf %50, %48 : vector<1x128xf32>
    %52 = arith.subf %49, %51 : vector<1x128xf32>
    %53 = vector.broadcast %48 : vector<1x128xf32> to vector<32x128xf32>
    %54 = arith.mulf %22, %53 : vector<32x128xf32>
    %55 = vector.broadcast %52 : vector<1x128xf32> to vector<32x128xf32>
    %56 = arith.addf %54, %55 : vector<32x128xf32>
    %cst_28 = arith.constant 0.000000e+00 : f32
    %57 = vector.broadcast %cst_28 : f32 to vector<32x128xf32>
    %58 = arith.maximumf %56, %57 : vector<32x128xf32>
    %c0_29 = arith.constant 0 : index
    %c0_30 = arith.constant 0 : index
    %59 = vector.load %arg7[%c0_29, %c0_30] : memref<32x128xf32, #tpu.memory_space<vmem>>, vector<32x128xf32>
    tpu.vector_store %arg7[%c0_29, %c0_30], %58 {strides = array<i32>} : memref<32x128xf32, #tpu.memory_space<vmem>>, vector<32x128xf32>,
    return
  }
}

</mosaic_0001>

<llo_original>
// kernel: pcb_activ_forward.1
$region0: #{pcb_activ_forward.1}
  #allocation0 [shape = 'u32[]', space=smem, size = 0x4, offset = 0x4, fixed_abs, tag = 'smem constant byte address 0x4 - core index']
  #allocation1 [shape = 'u32[144,128]{1,0:T(1,128)}', space=vmem, size = 0x12000, scoped, tag = 'internal scratch']
  %s0 = inlined_call_operand.vmem [shape: f32[32,432], index: 0, kind: input, shape index: {}]
  %s1 = inlined_call_operand.vmem [shape: f32[432,256], index: 1, kind: input, shape index: {}]
  %s2 = inlined_call_operand.vmem [shape: f32[1,128], index: 2, kind: input, shape index: {}]
  %s3 = inlined_call_operand.vmem [shape: f32[1,128], index: 3, kind: input, shape index: {}]
  %s4 = inlined_call_operand.vmem [shape: f32[1,128], index: 4, kind: input, shape index: {}]
  %s5 = inlined_call_operand.vmem [shape: f32[128,8], index: 5, kind: input, shape index: {}]
  %s6 = inlined_call_operand.vmem [shape: f32[8,128], index: 6, kind: input, shape index: {}]
  %s7 = inlined_call_operand.vmem [shape: f32[32,128], index: 7, kind: output, shape index: {0}]
  %s8 = inlined_call_operand.vmem [shape: f32[32,128], index: 8, kind: output, shape index: {1}]
  %9 = xla_tuple %s7, %s8
  %s10 = sld [smem:[#allocation0]]
  $region46: #{pcb_activ_forward.1} parent=0
    _
  %s12 = ssub.s32 1, %s10
  %s13 = scalar_select 0, %s12, %s10
  // Predicated region
  $region2: #{pcb_activ_forward.1} parent=0 // pred_check
    _
  $region3: #{pcb_activ_forward.1} parent=0 // pred_check_branch
    %15 = sbr.rel (0) target = $region5
  $region4: #{pcb_activ_forward.1} parent=0 // pred_region
    _
  $region5: #{pcb_activ_forward.1} parent=0 // pred_fallthru
    _
  // Predicated region
  $region6: #{pcb_activ_forward.1} parent=0 // pred_check
    _
  $region7: #{pcb_activ_forward.1} parent=0 // pred_check_branch
    %17 = sbr.rel (0) target = $region9
  $region8: #{pcb_activ_forward.1} parent=0 // pred_region
    _
  $region9: #{pcb_activ_forward.1} parent=0 // pred_fallthru
    _
  // Predicated region
  $region10: #{pcb_activ_forward.1} parent=0 // pred_check
    _
  $region11: #{pcb_activ_forward.1} parent=0 // pred_check_branch
    %19 = sbr.rel (0) target = $region13
  $region12: #{pcb_activ_forward.1} parent=0 // pred_region
    _
  $region13: #{pcb_activ_forward.1} parent=0 // pred_fallthru
    _
  // Predicated region
  $region14: #{pcb_activ_forward.1} parent=0 // pred_check
    _
  $region15: #{pcb_activ_forward.1} parent=0 // pred_check_branch
    %21 = sbr.rel (0) target = $region17
  $region16: #{pcb_activ_forward.1} parent=0 // pred_region
    _
  $region17: #{pcb_activ_forward.1} parent=0 // pred_fallthru
    _
  // Predicated region
  $region18: #{pcb_activ_forward.1} parent=0 // pred_check
    _
  $region19: #{pcb_activ_forward.1} parent=0 // pred_check_branch
    %23 = sbr.rel (0) target = $region21
  $region20: #{pcb_activ_forward.1} parent=0 // pred_region
    _
  $region21: #{pcb_activ_forward.1} parent=0 // pred_fallthru
    _
  // Predicated region
  $region22: #{pcb_activ_forward.1} parent=0 // pred_check
    _
  $region23: #{pcb_activ_forward.1} parent=0 // pred_check_branch
    %25 = sbr.rel (0) target = $region25
  $region24: #{pcb_activ_forward.1} parent=0 // pred_region
    _
  $region25: #{pcb_activ_forward.1} parent=0 // pred_fallthru
    _
  // Predicated region
  $region26: #{pcb_activ_forward.1} parent=0 // pred_check
    _
  $region27: #{pcb_activ_forward.1} parent=0 // pred_check_branch
    %27 = sbr.rel (0) target = $region29
  $region28: #{pcb_activ_forward.1} parent=0 // pred_region
    _
  $region29: #{pcb_activ_forward.1} parent=0 // pred_fallthru
    _
  %v28 = vld [vmem:[%s0] sm:$0xff]
  %v29 = vld [vmem:[%s0 + $0x8] sm:$0xff]
  %v30 = vld [vmem:[%s0 + $0x10] sm:$0xff]
  %v31 = vld [vmem:[%s0 + $0x18] sm:$0xff]
  %v32 = vld [vmem:[%s0 + $0x20] sm:$0xff]
  %v33 = vld [vmem:[%s0 + $0x28] sm:$0xff]
  %v34 = vld [vmem:[%s0 + $0x30] sm:$0xff]
  %v35 = vld [vmem:[%s0 + $0x38] sm:$0xff]
  %v36 = vld [vmem:[%s0 + $0x40] sm:$0xff]
  %v37 = vld [vmem:[%s0 + $0x48] sm:$0xff]
  %v38 = vld [vmem:[%s0 + $0x50] sm:$0xff]
  %v39 = vld [vmem:[%s0 + $0x58] sm:$0xff]
  %v40 = vld [vmem:[%s0 + $0x60] sm:$0xff]
  %v41 = vld [vmem:[%s0 + $0x68] sm:$0xff]
  %v42 = vld [vmem:[%s0 + $0x70] sm:$0xff]
  %v43 = vld [vmem:[%s0 + $0x78] sm:$0xff]
  %v44 = vld [vmem:[%s1] sm:$0xff]
  %v45 = vld [vmem:[%s1 + $0x8] sm:$0xff]
  %v46 = vld [vmem:[%s1 + $0x10] sm:$0xff]
  %v47 = vld [vmem:[%s1 + $0x18] sm:$0xff]
  %v48 = vld [vmem:[%s1 + $0x20] sm:$0xff]
  %v49 = vld [vmem:[%s1 + $0x28] sm:$0xff]
  %v50 = vld [vmem:[%s1 + $0x30] sm:$0xff]
  %v51 = vld [vmem:[%s1 + $0x38] sm:$0xff]
  %v52 = vld [vmem:[%s1 + $0x40] sm:$0xff]
  %v53 = vld [vmem:[%s1 + $0x48] sm:$0xff]
  %v54 = vld [vmem:[%s1 + $0x50] sm:$0xff]
  %v55 = vld [vmem:[%s1 + $0x58] sm:$0xff]
  %v56 = vld [vmem:[%s1 + $0x60] sm:$0xff]
  %v57 = vld [vmem:[%s1 + $0x68] sm:$0xff]
  %v58 = vld [vmem:[%s1 + $0x70] sm:$0xff]
  %v59 = vld [vmem:[%s1 + $0x78] sm:$0xff]
  %v60 = vld [vmem:[%s1 + $0x80] sm:$0xff]
  %v61 = vld [vmem:[%s1 + $0x88] sm:$0xff]
  %v62 = vld [vmem:[%s1 + $0x90] sm:$0xff]
  %v63 = vld [vmem:[%s1 + $0x98] sm:$0xff]
  %v64 = vld [vmem:[%s1 + $0xa0] sm:$0xff]
  %v65 = vld [vmem:[%s1 + $0xa8] sm:$0xff]
  %v66 = vld [vmem:[%s1 + $0xb0] sm:$0xff]
  %v67 = vld [vmem:[%s1 + $0xb8] sm:$0xff]
  %v68 = vld [vmem:[%s1 + $0xc0] sm:$0xff]
  %v69 = vld [vmem:[%s1 + $0xc8] sm:$0xff]
  %v70 = vld [vmem:[%s1 + $0xd0] sm:$0xff]
  %v71 = vld [vmem:[%s1 + $0xd8] sm:$0xff]
  %v72 = vld [vmem:[%s1 + $0xe0] sm:$0xff]
  %v73 = vld [vmem:[%s1 + $0xe8] sm:$0xff]
  %v74 = vld [vmem:[%s1 + $0xf0] sm:$0xff]
  %v75 = vld [vmem:[%s1 + $0xf8] sm:$0xff]
  %v76 = vld [vmem:[%s1 + $0x100] sm:$0xff]
  %v77 = vld [vmem:[%s1 + $0x108] sm:$0xff]
  %v78 = vld [vmem:[%s1 + $0x110] sm:$0xff]
  %v79 = vld [vmem:[%s1 + $0x118] sm:$0xff]
  %v80 = vld [vmem:[%s1 + $0x120] sm:$0xff]
  %v81 = vld [vmem:[%s1 + $0x128] sm:$0xff]
  %v82 = vld [vmem:[%s1 + $0x130] sm:$0xff]
  %v83 = vld [vmem:[%s1 + $0x138] sm:$0xff]
  %v84 = vld [vmem:[%s1 + $0x140] sm:$0xff]
  %v85 = vld [vmem:[%s1 + $0x148] sm:$0xff]
  %v86 = vld [vmem:[%s1 + $0x150] sm:$0xff]
  %v87 = vld [vmem:[%s1 + $0x158] sm:$0xff]
  %v88 = vld [vmem:[%s1 + $0x160] sm:$0xff]
  %v89 = vld [vmem:[%s1 + $0x168] sm:$0xff]
  %v90 = vld [vmem:[%s1 + $0x170] sm:$0xff]
  %v91 = vld [vmem:[%s1 + $0x178] sm:$0xff]
  %v92 = vld [vmem:[%s1 + $0x180] sm:$0xff]
  %v93 = vld [vmem:[%s1 + $0x188] sm:$0xff]
  %v94 = vld [vmem:[%s1 + $0x190] sm:$0xff]
  %v95 = vld [vmem:[%s1 + $0x198] sm:$0xff]
  %v96 = vld [vmem:[%s1 + $0x1a0] sm:$0xff]
  %v97 = vld [vmem:[%s1 + $0x1a8] sm:$0xff]
  %v98 = vld [vmem:[%s1 + $0x1b0] sm:$0xff]
  %v99 = vld [vmem:[%s1 + $0x1b8] sm:$0xff]
  %v100 = vld [vmem:[%s1 + $0x1c0] sm:$0xff]
  %v101 = vld [vmem:[%s1 + $0x1c8] sm:$0xff]
  %v102 = vld [vmem:[%s1 + $0x1d0] sm:$0xff]
  %v103 = vld [vmem:[%s1 + $0x1d8] sm:$0xff]
  %v104 = vld [vmem:[%s1 + $0x1e0] sm:$0xff]
  %v105 = vld [vmem:[%s1 + $0x1e8] sm:$0xff]
  %v106 = vld [vmem:[%s1 + $0x1f0] sm:$0xff]
  %v107 = vld [vmem:[%s1 + $0x1f8] sm:$0xff]
  %v108 = vld [vmem:[%s1 + $0x200] sm:$0xff]
  %v109 = vld [vmem:[%s1 + $0x208] sm:$0xff]
  %v110 = vld [vmem:[%s1 + $0x210] sm:$0xff]
  %v111 = vld [vmem:[%s1 + $0x218] sm:$0xff]
  %v112 = vld [vmem:[%s1 + $0x220] sm:$0xff]
  %v113 = vld [vmem:[%s1 + $0x228] sm:$0xff]
  %v114 = vld [vmem:[%s1 + $0x230] sm:$0xff]
  %v115 = vld [vmem:[%s1 + $0x238] sm:$0xff]
  %v116 = vld [vmem:[%s1 + $0x240] sm:$0xff]
  %v117 = vld [vmem:[%s1 + $0x248] sm:$0xff]
  %v118 = vld [vmem:[%s1 + $0x250] sm:$0xff]
  %v119 = vld [vmem:[%s1 + $0x258] sm:$0xff]
  %v120 = vld [vmem:[%s1 + $0x260] sm:$0xff]
  %v121 = vld [vmem:[%s1 + $0x268] sm:$0xff]
  %v122 = vld [vmem:[%s1 + $0x270] sm:$0xff]
  %v123 = vld [vmem:[%s1 + $0x278] sm:$0xff]
  %v124 = vld [vmem:[%s1 + $0x280] sm:$0xff]
  %v125 = vld [vmem:[%s1 + $0x288] sm:$0xff]
  %v126 = vld [vmem:[%s1 + $0x290] sm:$0xff]
  %v127 = vld [vmem:[%s1 + $0x298] sm:$0xff]
  %v128 = vld [vmem:[%s1 + $0x2a0] sm:$0xff]
  %v129 = vld [vmem:[%s1 + $0x2a8] sm:$0xff]
  %v130 = vld [vmem:[%s1 + $0x2b0] sm:$0xff]
  %v131 = vld [vmem:[%s1 + $0x2b8] sm:$0xff]
  %v132 = vld [vmem:[%s1 + $0x2c0] sm:$0xff]
  %v133 = vld [vmem:[%s1 + $0x2c8] sm:$0xff]
  %v134 = vld [vmem:[%s1 + $0x2d0] sm:$0xff]
  %v135 = vld [vmem:[%s1 + $0x2d8] sm:$0xff]
  %v136 = vld [vmem:[%s1 + $0x2e0] sm:$0xff]
  %v137 = vld [vmem:[%s1 + $0x2e8] sm:$0xff]
  %v138 = vld [vmem:[%s1 + $0x2f0] sm:$0xff]
  %v139 = vld [vmem:[%s1 + $0x2f8] sm:$0xff]
  %v140 = vld [vmem:[%s1 + $0x300] sm:$0xff]
  %v141 = vld [vmem:[%s1 + $0x308] sm:$0xff]
  %v142 = vld [vmem:[%s1 + $0x310] sm:$0xff]
  %v143 = vld [vmem:[%s1 + $0x318] sm:$0xff]
  %v144 = vld [vmem:[%s1 + $0x320] sm:$0xff]
  %v145 = vld [vmem:[%s1 + $0x328] sm:$0xff]
  %v146 = vld [vmem:[%s1 + $0x330] sm:$0xff]
  %v147 = vld [vmem:[%s1 + $0x338] sm:$0xff]
  %v148 = vld [vmem:[%s1 + $0x340] sm:$0xff]
  %v149 = vld [vmem:[%s1 + $0x348] sm:$0xff]
  %v150 = vld [vmem:[%s1 + $0x350] sm:$0xff]
  %v151 = vld [vmem:[%s1 + $0x358] sm:$0xff]
  %vm152 = vcmask 392192
  %v154 = vsel %vm152, %v31, 0
  %v157 = vsel %vm152, %v35, 0
  %v160 = vsel %vm152, %v39, 0
  %v163 = vsel %vm152, %v43, 0
  %165 = vmatprep.subr.mxu0 %v45
  %166 = vmatpush1.msra.mxu0 %v44
  %167 = vmatprep.subr.mxu0 %v47
  %168 = vmatpush1.msra.mxu0 %v46
  %169 = vmatprep.subr.mxu0 %v49
  %170 = vmatpush1.msra.mxu0 %v48
  %171 = vmatprep.subr.mxu0 %v51
  %172 = vmatpush1.msra.mxu0 %v50
  %173 = vmatprep.subr.mxu0 %v53
  %174 = vmatpush1.msra.mxu0 %v52
  %175 = vmatprep.subr.mxu0 %v55
  %176 = vmatpush1.msra.mxu0 %v54
  %177 = vmatprep.subr.mxu0 %v57
  %178 = vmatpush1.msra.mxu0 %v56
  %179 = vmatprep.subr.mxu0 %v59
  %180 = vmatpush1.msra.mxu0 %v58
  %181 = vmatprep.subr.mxu0 %v61
  %182 = vmatpush1.msra.mxu0 %v60
  %183 = vmatprep.subr.mxu0 %v63
  %184 = vmatpush1.msra.mxu0 %v62
  %185 = vmatprep.subr.mxu0 %v65
  %186 = vmatpush1.msra.mxu0 %v64
  %187 = vmatprep.subr.mxu0 %v67
  %188 = vmatpush1.msra.mxu0 %v66
  %189 = vmatprep.subr.mxu0 %v69
  %190 = vmatpush1.msra.mxu0 %v68
  %191 = vmatprep.subr.mxu0 %v71
  %192 = vmatpush1.msra.mxu0 %v70
  %193 = vmatprep.subr.mxu0 %v73
  %194 = vmatpush1.msra.mxu0 %v72
  %195 = vmatprep.subr.mxu0 %v75
  %196 = vmatpush1.msra.mxu0 %v74
  %197 = vmatprep.subr.mxu0 %v77
  %198 = vmatpush1.msra.mxu0 %v76
  %199 = vmatprep.subr.mxu0 %v79
  %200 = vmatpush1.msra.mxu0 %v78
  %201 = vmatprep.subr.mxu0 %v81
  %202 = vmatpush1.msra.mxu0 %v80
  %203 = vmatprep.subr.mxu0 %v83
  %204 = vmatpush1.msra.mxu0 %v82
  %205 = vmatprep.subr.mxu0 %v85
  %206 = vmatpush1.msra.mxu0 %v84
  %207 = vmatprep.subr.mxu0 %v87
  %208 = vmatpush1.msra.mxu0 %v86
  %209 = vmatprep.subr.mxu0 %v89
  %210 = vmatpush1.msra.mxu0 %v88
  %211 = vmatprep.subr.mxu0 %v91
  %212 = vmatpush1.msra.mxu0 %v90
  %213 = vmatprep.subr.mxu0 %v93
  %214 = vmatpush1.msra.mxu0 %v92
  %215 = vmatprep.subr.mxu0 %v95
  %216 = vmatpush1.msra.mxu0 %v94
  %217 = vmatprep.subr.mxu0 %v97
  %218 = vmatpush1.msra.mxu0 %v96
  %219 = vmatprep.subr.mxu0 %v99
  %220 = vmatpush1.msra.mxu0 %v98
  %221 = vmatprep.subr.mxu0 %v101
  %222 = vmatpush1.msra.mxu0 %v100
  %223 = vmatprep.subr.mxu0 %v103
  %224 = vmatpush1.msra.mxu0 %v102
  %225 = vmatprep.subr.mxu0 %v105
  %226 = vmatpush1.msra.mxu0 %v104
  %227 = vmatprep.subr.mxu0 %v107
  %228 = vmatpush1.msra.mxu0 %v106
  %229 = vmatprep.mubr.f32.mxu0 %v29
  %230 = vmatmul.mubr.f32.gmra.mrb[0].mxu0 %v28
  %v231 = vpop.f32.mrb[0].mxu0
  %v232 = vadd.f32 0.0, %v231
  %v233 = vpop.f32.mrb[0].mxu0
  %v234 = vadd.f32 0.0, %v233
  %235 = vmatprep.mubr.f32.mxu0 %v33
  %236 = vmatmul.mubr.f32.gmra.mrb[0].mxu0 %v32
  %v237 = vpop.f32.mrb[0].mxu0
  %v238 = vadd.f32 0.0, %v237
  %v239 = vpop.f32.mrb[0].mxu0
  %v240 = vadd.f32 0.0, %v239
  %241 = vmatprep.mubr.f32.mxu0 %v37
  %242 = vmatmul.mubr.f32.gmra.mrb[0].mxu0 %v36
  %v243 = vpop.f32.mrb[0].mxu0
  %v244 = vadd.f32 0.0, %v243
  %v245 = vpop.f32.mrb[0].mxu0
  %v246 = vadd.f32 0.0, %v245
  %247 = vmatprep.mubr.f32.mxu0 %v41
  %248 = vmatmul.mubr.f32.gmra.mrb[0].mxu0 %v40
  %v249 = vpop.f32.mrb[0].mxu0
  %v250 = vadd.f32 0.0, %v249
  %v251 = vpop.f32.mrb[0].mxu0
  %v252 = vadd.f32 0.0, %v251
  %253 = vdwg.mxu0
  %254 = vmatprep.subr.mxu0 %v109
  %255 = vmatpush1.msra.mxu0 %v108
  %256 = vmatprep.subr.mxu0 %v111
  %257 = vmatpush1.msra.mxu0 %v110
  %258 = vmatprep.subr.mxu0 %v113
  %259 = vmatpush1.msra.mxu0 %v112
  %260 = vmatprep.subr.mxu0 %v115
  %261 = vmatpush1.msra.mxu0 %v114
  %262 = vmatprep.subr.mxu0 %v117
  %263 = vmatpush1.msra.mxu0 %v116
  %264 = vmatprep.subr.mxu0 %v119
  %265 = vmatpush1.msra.mxu0 %v118
  %266 = vmatprep.subr.mxu0 %v121
  %267 = vmatpush1.msra.mxu0 %v120
  %268 = vmatprep.subr.mxu0 %v123
  %269 = vmatpush1.msra.mxu0 %v122
  %270 = vmatprep.subr.mxu0 %v125
  %271 = vmatpush1.msra.mxu0 %v124
  %272 = vmatprep.subr.mxu0 %v127
  %273 = vmatpush1.msra.mxu0 %v126
  %274 = vmatprep.subr.mxu0 %v129
  %275 = vmatpush1.msra.mxu0 %v128
  %276 = vmatprep.subr.mxu0 %v131
  %277 = vmatpush1.msra.mxu0 %v130
  %278 = vmatprep.subr.mxu0 %v133
  %279 = vmatpush1.msra.mxu0 %v132
  %280 = vmatprep.subr.mxu0 %v135
  %281 = vmatpush1.msra.mxu0 %v134
  %282 = vmatprep.subr.mxu0 %v137
  %283 = vmatpush1.msra.mxu0 %v136
  %284 = vmatprep.subr.mxu0 %v139
  %285 = vmatpush1.msra.mxu0 %v138
  %286 = vmatprep.subr.mxu0 %v141
  %287 = vmatpush1.msra.mxu0 %v140
  %288 = vmatprep.subr.mxu0 %v143
  %289 = vmatpush1.msra.mxu0 %v142
  %290 = vmatprep.subr.mxu0 %v145
  %291 = vmatpush1.msra.mxu0 %v144
  %292 = vmatprep.subr.mxu0 %v147
  %293 = vmatpush1.msra.mxu0 %v146
  %294 = vmatprep.subr.mxu0 %v149
  %295 = vmatpush1.msra.mxu0 %v148
  %296 = vmatprep.subr.mxu0 %v151
  %297 = vmatpush1.msra.mxu0 %v150
  %298 = vmatprep.subr.mxu0 0.0
  %299 = vmatpush1.msra.mxu0 0.0
  %300 = vmatprep.subr.mxu0 0.0
  %301 = vmatpush1.msra.mxu0 0.0
  %302 = vmatprep.subr.mxu0 0.0
  %303 = vmatpush1.msra.mxu0 0.0
  %304 = vmatprep.subr.mxu0 0.0
  %305 = vmatpush1.msra.mxu0 0.0
  %306 = vmatprep.subr.mxu0 0.0
  %307 = vmatpush1.msra.mxu0 0.0
  %308 = vmatprep.subr.mxu0 0.0
  %309 = vmatpush1.msra.mxu0 0.0
  %310 = vmatprep.subr.mxu0 0.0
  %311 = vmatpush1.msra.mxu0 0.0
  %312 = vmatprep.subr.mxu0 0.0
  %313 = vmatpush1.msra.mxu0 0.0
  %314 = vmatprep.subr.mxu0 0.0
  %315 = vmatpush1.msra.mxu0 0.0
  %316 = vmatprep.subr.mxu0 0.0
  %317 = vmatpush1.msra.mxu0 0.0
  %318 = vmatprep.mubr.f32.mxu0 %v154
  %319 = vmatmul.mubr.f32.gmra.mrb[0].mxu0 %v30
  %v320 = vpop.f32.mrb[0].mxu0
  %v321 = vadd.f32 %v232, %v320
  %v322 = vpop.f32.mrb[0].mxu0
  %v323 = vadd.f32 %v234, %v322
  %324 = vmatprep.mubr.f32.mxu0 %v157
  %325 = vmatmul.mubr.f32.gmra.mrb[0].mxu0 %v34
  %v326 = vpop.f32.mrb[0].mxu0
  %v327 = vadd.f32 %v238, %v326
  %v328 = vpop.f32.mrb[0].mxu0
  %v329 = vadd.f32 %v240, %v328
  %330 = vmatprep.mubr.f32.mxu0 %v160
  %331 = vmatmul.mubr.f32.gmra.mrb[0].mxu0 %v38
  %v332 = vpop.f32.mrb[0].mxu0
  %v333 = vadd.f32 %v244, %v332
  %v334 = vpop.f32.mrb[0].mxu0
  %v335 = vadd.f32 %v246, %v334
  %336 = vmatprep.mubr.f32.mxu0 %v163
  %337 = vmatmul.mubr.f32.gmra.mrb[0].mxu0 %v42
  %v338 = vpop.f32.mrb[0].mxu0
  %v339 = vadd.f32 %v250, %v338
  %v340 = vpop.f32.mrb[0].mxu0
  %v341 = vadd.f32 %v252, %v340
  %342 = vdwg.mxu0
  %v343 = vmax.f32 %v323, 0.0
  %v344 = vmax.f32 %v329, 0.0
  %v345 = vmax.f32 %v335, 0.0
  %v346 = vmax.f32 %v341, 0.0
  %v347 = vmin.f32 %v343, 1.0
  %v348 = vmin.f32 %v344, 1.0
  %v349 = vmin.f32 %v345, 1.0
  %v350 = vmin.f32 %v346, 1.0
  %vm351 = vcmp.gt.f32.partialorder %v323, 0.0
  %vm352 = vcmp.gt.f32.partialorder %v329, 0.0
  %vm353 = vcmp.gt.f32.partialorder %v335, 0.0
  %vm354 = vcmp.gt.f32.partialorder %v341, 0.0
  %v355 = vadd.f32 %v323, 1e-08
  %v356 = vadd.f32 %v329, 1e-08
  %v357 = vadd.f32 %v335, 1e-08
  %v358 = vadd.f32 %v341, 1e-08
  %v359 = vrcp.pop %v355
  %v360 = vmul.f32 36.0, %v359
  %v361 = vrcp.pop %v356
  %v362 = vmul.f32 36.0, %v361
  %v363 = vrcp.pop %v357
  %v364 = vmul.f32 36.0, %v363
  %v365 = vrcp.pop %v358
  %v366 = vmul.f32 36.0, %v365
  %v367 = vsel %vm351, %v360, 0.0
  %v368 = vsel %vm352, %v362, 0.0
  %v369 = vsel %vm353, %v364, 0.0
  %v370 = vsel %vm354, %v366, 0.0
  %v371 = vmul.f32 %v367, %v347
  %v372 = vmul.f32 %v368, %v348
  %v373 = vmul.f32 %v369, %v349
  %v374 = vmul.f32 %v370, %v350
  %v375 = vmul.f32 %v321, %v371
  %v376 = vmul.f32 %v327, %v372
  %v377 = vmul.f32 %v333, %v373
  %v378 = vmul.f32 %v339, %v374
  %v379 = vld [vmem:[%s2] sm:$0x1]
  %v381 = vlaneseq
  %v382 = vshrl.u32 %v381, 7
  %v383 = vsub.s32 0, %v382
  %v384 = vrot.slane %v379, %v383
  %v386 = vadd.f32 %v375, %v384
  %v387 = vadd.f32 %v376, %v384
  %v388 = vadd.f32 %v377, %v384
  %v389 = vadd.f32 %v378, %v384
  %v390 = vmul.f32 %v386, %v347
  %v391 = vmul.f32 %v387, %v348
  %v392 = vmul.f32 %v388, %v349
  %v393 = vmul.f32 %v389, %v350
  %394 = vst [vmem:[%s8] sm:$0xff] %v347
  %395 = vst [vmem:[%s8 + $0x8] sm:$0xff] %v348
  %396 = vst [vmem:[%s8 + $0x10] sm:$0xff] %v349
  %397 = vst [vmem:[%s8 + $0x18] sm:$0xff] %v350
  %v398 = vadd.f32 %v390, %v391
  %v399 = vadd.f32 %v398, %v392
  %v400 = vadd.f32 %v399, %v393
  %v401 = vrot.slane %v400, 4
  %v402 = vadd.f32 %v400, %v401
  %v403 = vrot.slane %v402, 2
  %v404 = vadd.f32 %v402, %v403
  %v405 = vrot.slane %v404, 1
  %v406 = vadd.f32 %v404, %v405
  %v407 = vmul.f32 %v390, %v390
  %v408 = vmul.f32 %v391, %v391
  %v409 = vmul.f32 %v392, %v392
  %v410 = vmul.f32 %v393, %v393
  %v411 = vadd.f32 %v407, %v408
  %v412 = vadd.f32 %v411, %v409
  %v413 = vadd.f32 %v412, %v410
  %v414 = vrot.slane %v413, 4
  %v415 = vadd.f32 %v413, %v414
  %v416 = vrot.slane %v415, 2
  %v417 = vadd.f32 %v415, %v416
  %v418 = vrot.slane %v417, 1
  %v419 = vadd.f32 %v417, %v418
  %vm420 = vcmask 1040384
  %v421 = vsel %vm420, %v406, %v419
  %v422 = vld [vmem:[%s5] sm:$0xff]
  %v423 = vld [vmem:[%s5 + $0x8] sm:$0xff]
  %v424 = vld [vmem:[%s5 + $0x10] sm:$0xff]
  %v425 = vld [vmem:[%s5 + $0x18] sm:$0xff]
  %v426 = vld [vmem:[%s5 + $0x20] sm:$0xff]
  %v427 = vld [vmem:[%s5 + $0x28] sm:$0xff]
  %v428 = vld [vmem:[%s5 + $0x30] sm:$0xff]
  %v429 = vld [vmem:[%s5 + $0x38] sm:$0xff]
  %v430 = vld [vmem:[%s5 + $0x40] sm:$0xff]
  %v431 = vld [vmem:[%s5 + $0x48] sm:$0xff]
  %v432 = vld [vmem:[%s5 + $0x50] sm:$0xff]
  %v433 = vld [vmem:[%s5 + $0x58] sm:$0xff]
  %v434 = vld [vmem:[%s5 + $0x60] sm:$0xff]
  %v435 = vld [vmem:[%s5 + $0x68] sm:$0xff]
  %v436 = vld [vmem:[%s5 + $0x70] sm:$0xff]
  %v437 = vld [vmem:[%s5 + $0x78] sm:$0xff]
  %438 = vmatprep.subr.mxu0 0.0
  %439 = vmatpush1.msra.mxu0 %v422
  %440 = vmatprep.subr.mxu0 0.0
  %441 = vmatpush1.msra.mxu0 %v423
  %442 = vmatprep.subr.mxu0 0.0
  %443 = vmatpush1.msra.mxu0 %v424
  %444 = vmatprep.subr.mxu0 0.0
  %445 = vmatpush1.msra.mxu0 %v425
  %446 = vmatprep.subr.mxu0 0.0
  %447 = vmatpush1.msra.mxu0 %v426
  %448 = vmatprep.subr.mxu0 0.0
  %449 = vmatpush1.msra.mxu0 %v427
  %450 = vmatprep.subr.mxu0 0.0
  %451 = vmatpush1.msra.mxu0 %v428
  %452 = vmatprep.subr.mxu0 0.0
  %453 = vmatpush1.msra.mxu0 %v429
  %454 = vmatprep.subr.mxu0 0.0
  %455 = vmatpush1.msra.mxu0 %v430
  %456 = vmatprep.subr.mxu0 0.0
  %457 = vmatpush1.msra.mxu0 %v431
  %458 = vmatprep.subr.mxu0 0.0
  %459 = vmatpush1.msra.mxu0 %v432
  %460 = vmatprep.subr.mxu0 0.0
  %461 = vmatpush1.msra.mxu0 %v433
  %462 = vmatprep.subr.mxu0 0.0
  %463 = vmatpush1.msra.mxu0 %v434
  %464 = vmatprep.subr.mxu0 0.0
  %465 = vmatpush1.msra.mxu0 %v435
  %466 = vmatprep.subr.mxu0 0.0
  %467 = vmatpush1.msra.mxu0 %v436
  %468 = vmatprep.subr.mxu0 0.0
  %469 = vmatpush1.msra.mxu0 %v437
  %470 = vmatprep.subr.mxu0 0.0
  %471 = vmatpush1.msra.mxu0 0.0
  %472 = vmatprep.subr.mxu0 0.0
  %473 = vmatpush1.msra.mxu0 0.0
  %474 = vmatprep.subr.mxu0 0.0
  %475 = vmatpush1.msra.mxu0 0.0
  %476 = vmatprep.subr.mxu0 0.0
  %477 = vmatpush1.msra.mxu0 0.0
  %478 = vmatprep.subr.mxu0 0.0
  %479 = vmatpush1.msra.mxu0 0.0
  %480 = vmatprep.subr.mxu0 0.0
  %481 = vmatpush1.msra.mxu0 0.0
  %482 = vmatprep.subr.mxu0 0.0
  %483 = vmatpush1.msra.mxu0 0.0
  %484 = vmatprep.subr.mxu0 0.0
  %485 = vmatpush1.msra.mxu0 0.0
  %486 = vmatprep.subr.mxu0 0.0
  %487 = vmatpush1.msra.mxu0 0.0
  %488 = vmatprep.subr.mxu0 0.0
  %489 = vmatpush1.msra.mxu0 0.0
  %490 = vmatprep.subr.mxu0 0.0
  %491 = vmatpush1.msra.mxu0 0.0
  %492 = vmatprep.subr.mxu0 0.0
  %493 = vmatpush1.msra.mxu0 0.0
  %494 = vmatprep.subr.mxu0 0.0
  %495 = vmatpush1.msra.mxu0 0.0
  %496 = vmatprep.subr.mxu0 0.0
  %497 = vmatpush1.msra.mxu0 0.0
  %498 = vmatprep.subr.mxu0 0.0
  %499 = vmatpush1.msra.mxu0 0.0
  %500 = vmatprep.subr.mxu0 0.0
  %501 = vmatpush1.msra.mxu0 0.0
  %502 = vmatprep.mubr.f32.mxu0 0.0
  %503 = vmatmul.mubr.f32.gmra.mrb[0].mxu0 %v421
  %v504 = vpop.f32.mrb[0].mxu0
  %v505 = vadd.f32 0.0, %v504
  %v506 = vpop.f32.mrb[0].mxu0
  %507 = vdwg.mxu0
  %v508 = vmul.f32 %v505, 0.001953125
  %v509 = vmul.f32 %v508, %v508
  %v511 = vrot.slane %v509, 7
  %v513 = vsub.f32 %v508, %v511
  %v514 = vmax.f32 %v513, 0.0
  %v515 = vadd.f32 %v514, 1e-05
  %v516 = vrsqrt.pop %v515
  %v517 = vsel %vm420, %v508, %v516
  %v518 = vld [vmem:[%s6] sm:$0xff]
  %vm519 = vcmask 64512
  %v521 = vsel %vm519, %v517, 0
  %523 = vmatprep.subr.mxu0 0.0
  %524 = vmatpush1.msra.mxu0 %v518
  %525 = vmatprep.subr.mxu0 0.0
  %526 = vmatpush1.msra.mxu0 0.0
  %527 = vmatprep.subr.mxu0 0.0
  %528 = vmatpush1.msra.mxu0 0.0
  %529 = vmatprep.subr.mxu0 0.0
  %530 = vmatpush1.msra.mxu0 0.0
  %531 = vmatprep.subr.mxu0 0.0
  %532 = vmatpush1.msra.mxu0 0.0
  %533 = vmatprep.subr.mxu0 0.0
  %534 = vmatpush1.msra.mxu0 0.0
  %535 = vmatprep.subr.mxu0 0.0
  %536 = vmatpush1.msra.mxu0 0.0
  %537 = vmatprep.subr.mxu0 0.0
  %538 = vmatpush1.msra.mxu0 0.0
  %539 = vmatprep.subr.mxu0 0.0
  %540 = vmatpush1.msra.mxu0 0.0
  %541 = vmatprep.subr.mxu0 0.0
  %542 = vmatpush1.msra.mxu0 0.0
  %543 = vmatprep.subr.mxu0 0.0
  %544 = vmatpush1.msra.mxu0 0.0
  %545 = vmatprep.subr.mxu0 0.0
  %546 = vmatpush1.msra.mxu0 0.0
  %547 = vmatprep.subr.mxu0 0.0
  %548 = vmatpush1.msra.mxu0 0.0
  %549 = vmatprep.subr.mxu0 0.0
  %550 = vmatpush1.msra.mxu0 0.0
  %551 = vmatprep.subr.mxu0 0.0
  %552 = vmatpush1.msra.mxu0 0.0
  %553 = vmatprep.subr.mxu0 0.0
  %554 = vmatpush1.msra.mxu0 0.0
  %555 = vmatprep.subr.mxu0 0.0
  %556 = vmatpush1.msra.mxu0 0.0
  %557 = vmatprep.subr.mxu0 0.0
  %558 = vmatpush1.msra.mxu0 0.0
  %559 = vmatprep.subr.mxu0 0.0
  %560 = vmatpush1.msra.mxu0 0.0
  %561 = vmatprep.subr.mxu0 0.0
  %562 = vmatpush1.msra.mxu0 0.0
  %563 = vmatprep.subr.mxu0 0.0
  %564 = vmatpush1.msra.mxu0 0.0
  %565 = vmatprep.subr.mxu0 0.0
  %566 = vmatpush1.msra.mxu0 0.0
  %567 = vmatprep.subr.mxu0 0.0
  %568 = vmatpush1.msra.mxu0 0.0
  %569 = vmatprep.subr.mxu0 0.0
  %570 = vmatpush1.msra.mxu0 0.0
  %571 = vmatprep.subr.mxu0 0.0
  %572 = vmatpush1.msra.mxu0 0.0
  %573 = vmatprep.subr.mxu0 0.0
  %574 = vmatpush1.msra.mxu0 0.0
  %575 = vmatprep.subr.mxu0 0.0
  %576 = vmatpush1.msra.mxu0 0.0
  %577 = vmatprep.subr.mxu0 0.0
  %578 = vmatpush1.msra.mxu0 0.0
  %579 = vmatprep.subr.mxu0 0.0
  %580 = vmatpush1.msra.mxu0 0.0
  %581 = vmatprep.subr.mxu0 0.0
  %582 = vmatpush1.msra.mxu0 0.0
  %583 = vmatprep.subr.mxu0 0.0
  %584 = vmatpush1.msra.mxu0 0.0
  %585 = vmatprep.subr.mxu0 0.0
  %586 = vmatpush1.msra.mxu0 0.0
  %587 = vmatprep.mubr.f32.mxu0 0.0
  %588 = vmatmul.mubr.f32.gmra.mrb[0].mxu0 %v521
  %v589 = vpop.f32.mrb[0].mxu0
  %v590 = vadd.f32 0.0, %v589
  %v591 = vpop.f32.mrb[0].mxu0
  %592 = vdwg.mxu0
  %v593 = vld [vmem:[%s3] sm:$0x1]
  %v596 = vunpack.c.l.s4 1966171168
  %v597 = vunpack.c.0.s8 %v596
  %v598 = vlaneseq
  %v599 = vshrl.u32 %v598, 7
  %v600 = vsub.s32 %v597, %v599
  %v601 = vrot.slane %v590, %v600
  %v602 = vcombine.high %v601, %v601
  %v604 = vunpack.c.l.s4 1966171168
  %v605 = vunpack.c.0.s8 %v604
  %v606 = vlaneseq
  %v607 = vshrl.u32 %v606, 7
  %v608 = vsub.s32 %v605, %v607
  %v609 = vrot.slane %v602, %v608
  %v611 = vmul.f32 %v593, %v609
  %v612 = vld [vmem:[%s4] sm:$0x1]
  %v613 = vmul.f32 %v590, %v611
  %v614 = vsub.f32 %v612, %v613
  %v616 = vlaneseq
  %v617 = vshrl.u32 %v616, 7
  %v618 = vsub.s32 0, %v617
  %v619 = vrot.slane %v611, %v618
  %v621 = vmul.f32 %v390, %v619
  %v622 = vmul.f32 %v391, %v619
  %v623 = vmul.f32 %v392, %v619
  %v624 = vmul.f32 %v393, %v619
  %v626 = vlaneseq
  %v627 = vshrl.u32 %v626, 7
  %v628 = vsub.s32 0, %v627
  %v629 = vrot.slane %v614, %v628
  %v631 = vadd.f32 %v621, %v629
  %v632 = vadd.f32 %v622, %v629
  %v633 = vadd.f32 %v623, %v629
  %v634 = vadd.f32 %v624, %v629
  %v635 = vmax.f32 %v631, 0.0
  %v636 = vmax.f32 %v632, 0.0
  %v637 = vmax.f32 %v633, 0.0
  %v638 = vmax.f32 %v634, 0.0
  %639 = vst [vmem:[%s7] sm:$0xff] %v635
  %640 = vst [vmem:[%s7 + $0x8] sm:$0xff] %v636
  %641 = vst [vmem:[%s7 + $0x10] sm:$0xff] %v637
  %642 = vst [vmem:[%s7 + $0x18] sm:$0xff] %v638
  // Predicated region
  $region30: #{pcb_activ_forward.1} parent=0 // pred_check
    _
  $region31: #{pcb_activ_forward.1} parent=0 // pred_check_branch
    %644 = sbr.rel (0) target = $region33
  $region32: #{pcb_activ_forward.1} parent=0 // pred_region
    _
  $region33: #{pcb_activ_forward.1} parent=0 // pred_fallthru
    _
  // Predicated region
  $region34: #{pcb_activ_forward.1} parent=0 // pred_check
    _
  $region35: #{pcb_activ_forward.1} parent=0 // pred_check_branch
    %646 = sbr.rel (0) target = $region37
  $region36: #{pcb_activ_forward.1} parent=0 // pred_region
    _
  $region37: #{pcb_activ_forward.1} parent=0 // pred_fallthru
    _
  // Predicated region
  $region38: #{pcb_activ_forward.1} parent=0 // pred_check
    _
  $region39: #{pcb_activ_forward.1} parent=0 // pred_check_branch
    %648 = sbr.rel (0) target = $region41
  $region40: #{pcb_activ_forward.1} parent=0 // pred_region
    _
  $region41: #{pcb_activ_forward.1} parent=0 // pred_fallthru
    _
  // Predicated region
  $region42: #{pcb_activ_forward.1} parent=0 // pred_check
    _
  $region43: #{pcb_activ_forward.1} parent=0 // pred_check_branch
    %650 = sbr.rel (0) target = $region45
  $region44: #{pcb_activ_forward.1} parent=0 // pred_region
    _
  $region45: #{pcb_activ_forward.1} parent=0 // pred_fallthru
    _

</llo_original>
